<compile_context>
chip_gen: v7x
topology: tpu7x:2x2x1
jax: 0.10.0
libtpu: 0.0.40
codegen_flags: <defaults>
</compile_context>

<pallas_src>
import jax
import jax.numpy as jnp
from jax.experimental import pallas as pl
from jax.experimental.pallas import tpu as pltpu


def _round_up(x: int, m: int) -> int:
    return (x + m - 1) // m * m


def _is_v7x() -> bool:
    try:
        kind = jax.devices()[0].device_kind.lower()
        return ("v7" in kind) or ("7x" in kind)
    except Exception:
        return False


def _select_tile(n: int, d: int, itemsize: int) -> int:
    # Small-N fast path: a single row tile, 16-aligned for bf16 sublane packing.
    if n <= 256:
        return _round_up(max(n, 16), 16)
    budget = 24 << 20  # conservative working-set budget (double-buffered inputs + acc)
    candidates = [256, 128]
    if n >= 1024 and not _is_v7x():
        # v6e is HBM-bound at tm=256 when streaming bf16; 512 ~doubles the
        # arithmetic intensity.  Keep 256 on v7x (64 MiB VMEM, 3.2 TB/s HBM).
        candidates = [512] + candidates
    for tm in candidates:
        if 4 * tm * d * itemsize + tm * tm * 4 <= budget:
            return tm
    return 128  # TODO(synk): K-tile the feature dim instead of this fallback.


def _make_kernel(steps_per_chunk: int, num_pairs: int, needs_valid_gate: bool):
    def kernel(i_ids_ref, j_ids_ref, xi_ref, xj_ref, o_ref, acc_ref):
        c = pl.program_id(0)   # chunk (parallel across TensorCores on v7x)
        s = pl.program_id(1)   # step within chunk (arbitrary / reduction)

        @pl.when(s == 0)
        def _init():
            acc_ref[...] = jnp.zeros_like(acc_ref)

        t = c * steps_per_chunk + s
        i_blk = i_ids_ref[t]
        j_blk = j_ids_ref[t]

        # Rows are already normalized (and optionally bf16) by the prepass;
        # contract the feature axis of both blocks directly on the MXU.
        sim = jax.lax.dot_general(
            xi_ref[...], xj_ref[...],
            dimension_numbers=(((1,), (1,)), ((), ())),
            preferred_element_type=jnp.float32,
        )
        sq = sim * sim

        is_diag = i_blk == j_blk
        off_cond = jnp.logical_not(is_diag)
        diag_cond = is_diag
        if needs_valid_gate:
            valid = t < num_pairs           # padded tail slots are no-ops
            off_cond = jnp.logical_and(valid, off_cond)
            diag_cond = jnp.logical_and(valid, diag_cond)

        # Off-diagonal tile pairs appear twice in the symmetric sim matrix,
        # diagonal pairs once:  full sum(sim^2) == 2 * sum(acc).
        @pl.when(off_cond)
        def _off():
            acc_ref[...] += sq

        @pl.when(diag_cond)
        def _diag():
            acc_ref[...] += 0.5 * sq

        @pl.when(s == steps_per_chunk - 1)
        def _finalize():
            partial = 2.0 * jnp.sum(acc_ref[...])
            o_ref[...] = jnp.zeros(o_ref.shape, jnp.float32) + partial

    return kernel


def contrastive_loss(code: jax.Array, *, tile: int | None = None,
                     use_bf16: bool = True) -> jax.Array:
    """code: [N, D] float array.  Returns scalar float32 loss.

    Note: use_bf16=True (default) rounds the normalized matmul operands to
    bf16 (~1e-3 relative shift of the loss); accumulation stays f32.
    Pass use_bf16=False for the (near) bit-faithful f32 path.
    """
    code = jnp.asarray(code)
    n, d = code.shape
    compute_dtype = jnp.bfloat16 if use_bf16 else jnp.float32
    itemsize = jnp.dtype(compute_dtype).itemsize

    # ---- Prepass (plain JAX, O(N*D)): normalize once, trace, cast, pad. ----
    x = code.astype(jnp.float32)
    sumsq = jnp.sum(x * x, axis=-1, keepdims=True)
    # torch's max(norm, 1e-12) clamp == rsqrt(max(sumsq, 1e-24)).
    inv = jax.lax.rsqrt(jnp.maximum(sumsq, 1e-24))
    trace = jnp.sum(sumsq * (inv * inv))            # trace(sim) = sum_i ||xn_i||^2
    xn = (x * inv).astype(compute_dtype)

    if tile is None:
        tm = _select_tile(n, d, itemsize)
    else:
        tm = _round_up(int(tile), 16)               # 16-align for bf16 packing

    padded_n = _round_up(n, tm)
    if padded_n != n:
        # Zero rows are exact: they contribute nothing to sum(sim^2); trace was
        # computed on the real rows above.
        xn = jnp.pad(xn, ((0, padded_n - n), (0, 0)))
    nt = padded_n // tm

    # Upper-triangular tile pairs (i <= j), row-major so the lhs block index is
    # constant within each row's run of steps (lhs re-DMA elided at runtime).
    pairs = [(i, j) for i in range(nt) for j in range(i, nt)]
    npairs = len(pairs)

    # Split into balanced chunks on a leading "parallel" axis (v7x: 2 TCs).
    nc = 2 if npairs > 1 else 1
    spc = -(-npairs // nc)                          # steps per chunk
    total_slots = nc * spc
    # Pad with duplicates of the last pair: same block indices as the previous
    # step -> no extra DMA; compute is gated off via `t < npairs`.
    pairs = pairs + [pairs[-1]] * (total_slots - npairs)
    i_ids = jnp.asarray([p[0] for p in pairs], dtype=jnp.int32)
    j_ids = jnp.asarray([p[1] for p in pairs], dtype=jnp.int32)

    # Explicit VMEM cap: 2 inputs x 2 buffers x (tm,D) blocks + (tm,tm) acc.
    footprint = 4 * tm * d * itemsize + tm * tm * 4 + (1 << 20)
    vmem_limit = int(min(max(footprint + (8 << 20), 32 << 20), 100 << 20))

    cost = pl.CostEstimate(
        flops=int(2 * npairs * tm * tm * d),
        transcendentals=0,
        bytes_accessed=int((nt + npairs) * tm * d * itemsize + nc * 8 * 128 * 4),
    )

    grid_spec = pltpu.PrefetchScalarGridSpec(
        num_scalar_prefetch=2,
        grid=(nc, spc),
        in_specs=[
            pl.BlockSpec((tm, d), lambda c, s, io, jo: (io[c * spc + s], 0)),
            pl.BlockSpec((tm, d), lambda c, s, io, jo: (jo[c * spc + s], 0)),
        ],
        out_specs=pl.BlockSpec((1, 8, 128), lambda c, s, io, jo: (c, 0, 0)),
        scratch_shapes=[pltpu.VMEM((tm, tm), jnp.float32)],
    )

    partials = pl.pallas_call(
        _make_kernel(spc, npairs, total_slots != npairs),
        out_shape=jax.ShapeDtypeStruct((nc, 8, 128), jnp.float32),
        grid_spec=grid_spec,
        compiler_params=pltpu.CompilerParams(
            dimension_semantics=("parallel", "arbitrary"),
            vmem_limit_bytes=vmem_limit,
        ),
        cost_estimate=cost,
    )(i_ids, j_ids, xn, xn)

    total_sq = jnp.sum(partials[:, 0, 0])
    n_f = float(n)
    # mean((sim - I)^2) = (sum(sim^2) - 2*trace(sim) + N) / N^2
    return (total_sq - 2.0 * trace + n_f) / (n_f * n_f)


class ContrastiveLoss:
    """JAX/Pallas equivalent of the PyTorch ContrastiveLoss module."""

    def __init__(self, key: str):
        self.key = key

    def __call__(self, model_output: dict) -> jax.Array:
        return contrastive_loss(model_output[self.key])


def _reference_loss(code):
    xn = code / jnp.maximum(jnp.linalg.norm(code, axis=-1, keepdims=True), 1e-12)
    sim = xn @ xn.T
    return jnp.mean((sim - jnp.eye(code.shape[0], dtype=sim.dtype)) ** 2)


if __name__ == "__main__":
    # Small deterministic example: N=8 samples, D=32 features.
    rng = jax.random.PRNGKey(0)
    code = jax.random.normal(rng, (8, 32), dtype=jnp.float32)
    ref = _reference_loss(code)

    loss_fn = ContrastiveLoss(key="code")
    loss = loss_fn({"code": code})               # default: bf16 MXU operands
    jax.block_until_ready(loss)
    assert jnp.allclose(loss, ref, atol=1e-2, rtol=5e-2), (loss, ref)

    # f32 path is (near) bit-faithful to the PyTorch math.
    loss_f32 = contrastive_loss(code, use_bf16=False)
    jax.block_until_ready(loss_f32)
    assert jnp.allclose(loss_f32, ref, atol=1e-5, rtol=1e-5), (loss_f32, ref)

    # Multi-tile / padded / chunked path: N=40 padded to 48, nt=3, 6 tile pairs
    # split over 2 "parallel" chunks.
    code2 = jax.random.normal(jax.random.PRNGKey(1), (40, 32), dtype=jnp.float32)
    ref2 = _reference_loss(code2)
    loss2_f32 = contrastive_loss(code2, tile=16, use_bf16=False)
    jax.block_until_ready(loss2_f32)
    assert jnp.allclose(loss2_f32, ref2, atol=1e-5, rtol=1e-5), (loss2_f32, ref2)
    loss2_bf16 = contrastive_loss(code2, tile=16)
    jax.block_until_ready(loss2_bf16)
    assert jnp.allclose(loss2_bf16, ref2, atol=1e-2, rtol=5e-2), (loss2_bf16, ref2)

    # Odd pair count: exercises the padded (validity-gated) grid slot.
    code3 = jax.random.normal(jax.random.PRNGKey(2), (24, 32), dtype=jnp.float32)
    ref3 = _reference_loss(code3)
    loss3 = contrastive_loss(code3, tile=16, use_bf16=False)
    jax.block_until_ready(loss3)
    assert jnp.allclose(loss3, ref3, atol=1e-5, rtol=1e-5), (loss3, ref3)

    print("KERNEL_OK")
</pallas_src>

<mosaic_0001>
module attributes {stable_mosaic.version = 11 : i64} {
  func.func @kernel(%arg0: i32, %arg1: i32, %arg2: memref<1xi32, #tpu.memory_space<smem>>, %arg3: memref<1xi32, #tpu.memory_space<smem>>, %arg4: memref<16x32xbf16, #tpu.memory_space<vmem>>, %arg5: memref<16x32xbf16, #tpu.memory_space<vmem>>, %arg6: memref<1x8x128xf32, #tpu.memory_space<vmem>>, %arg7: memref<16x16xf32, #tpu.memory_space<vmem>>) attributes {dimension_semantics = [#tpu.dimension_semantics<parallel>, #tpu.dimension_semantics<arbitrary>], iteration_bounds = array<i64: 1, 1>, scalar_prefetch = 2 : i64, scratch_operands = 1 : i64, tpu.core_type = #tpu.core_type<tc>, window_params = [{transform_indices = @transform_0, window_bounds = array<i64: 16, 32>}, {transform_indices = @transform_1, window_bounds = array<i64: 16, 32>}, {transform_indices = @transform_2, window_bounds = array<i64: 1, 8, 128>}]} {
    %c0_i32 = arith.constant 0 : i32
    %0 = arith.cmpi eq, %arg1, %c0_i32 : i32
    %1 = arith.extui %0 : i1 to i32
    %c0_i32_0 = arith.constant 0 : i32
    %2 = arith.cmpi ne, %1, %c0_i32_0 : i32
    scf.if %2 {
      %cst_8 = arith.constant 0.000000e+00 : f32
      %22 = vector.broadcast %cst_8 : f32 to vector<16x16xf32>
      %c0_9 = arith.constant 0 : index
      %c0_10 = arith.constant 0 : index
      %23 = vector.load %arg7[%c0_9, %c0_10] : memref<16x16xf32, #tpu.memory_space<vmem>>, vector<16x16xf32>
      tpu.vector_store %arg7[%c0_9, %c0_10], %22 {strides = array<i32>} : memref<16x16xf32, #tpu.memory_space<vmem>>, vector<16x16xf32>,
    } else {
    }
    %c1_i32 = arith.constant 1 : i32
    %3 = arith.muli %arg0, %c1_i32 : i32
    %4 = arith.addi %3, %arg1 : i32
    %5 = arith.index_cast %4 : i32 to index
    %6 = memref.load %arg2[%5] : memref<1xi32, #tpu.memory_space<smem>>
    %7 = arith.index_cast %4 : i32 to index
    %8 = memref.load %arg3[%7] : memref<1xi32, #tpu.memory_space<smem>>
    %c0 = arith.constant 0 : index
    %c0_1 = arith.constant 0 : index
    %9 = vector.load %arg4[%c0, %c0_1] : memref<16x32xbf16, #tpu.memory_space<vmem>>, vector<16x32xbf16>
    %c0_2 = arith.constant 0 : index
    %c0_3 = arith.constant 0 : index
    %10 = vector.load %arg5[%c0_2, %c0_3] : memref<16x32xbf16, #tpu.memory_space<vmem>>, vector<16x32xbf16>
    %cst = arith.constant dense<0.000000e+00> : vector<16x16xf32>
    %11 = tpu.matmul %9, %10, %cst {dimension_numbers = #tpu.dot_dimension_numbers<[1], [1], [0], [0], [0, 0, 1, 0], [], []>} : vector<16x32xbf16>, vector<16x32xbf16>, vector<16x16xf32> -> vector<16x16xf32>
    %12 = arith.mulf %11, %11 : vector<16x16xf32>
    %13 = arith.cmpi eq, %6, %8 : i32
    %true = arith.constant true
    %14 = arith.xori %13, %true : i1
    %15 = arith.extui %14 : i1 to i32
    %c0_i32_4 = arith.constant 0 : i32
    %16 = arith.cmpi ne, %15, %c0_i32_4 : i32
    scf.if %16 {
      %c0_8 = arith.constant 0 : index
      %c0_9 = arith.constant 0 : index
      %22 = vector.load %arg7[%c0_8, %c0_9] : memref<16x16xf32, #tpu.memory_space<vmem>>, vector<16x16xf32>
      %23 = arith.addf %22, %12 : vector<16x16xf32>
      %c0_10 = arith.constant 0 : index
      %c0_11 = arith.constant 0 : index
      %24 = vector.load %arg7[%c0_10, %c0_11] : memref<16x16xf32, #tpu.memory_space<vmem>>, vector<16x16xf32>
      tpu.vector_store %arg7[%c0_10, %c0_11], %23 {strides = array<i32>} : memref<16x16xf32, #tpu.memory_space<vmem>>, vector<16x16xf32>,
    } else {
    }
    %17 = arith.extui %13 : i1 to i32
    %c0_i32_5 = arith.constant 0 : i32
    %18 = arith.cmpi ne, %17, %c0_i32_5 : i32
    scf.if %18 {
      %c0_8 = arith.constant 0 : index
      %c0_9 = arith.constant 0 : index
      %22 = vector.load %arg7[%c0_8, %c0_9] : memref<16x16xf32, #tpu.memory_space<vmem>>, vector<16x16xf32>
      %cst_10 = arith.constant 5.000000e-01 : f32
      %23 = vector.broadcast %cst_10 : f32 to vector<16x16xf32>
      %24 = arith.mulf %23, %12 : vector<16x16xf32>
      %25 = arith.addf %22, %24 : vector<16x16xf32>
      %c0_11 = arith.constant 0 : index
      %c0_12 = arith.constant 0 : index
      %26 = vector.load %arg7[%c0_11, %c0_12] : memref<16x16xf32, #tpu.memory_space<vmem>>, vector<16x16xf32>
      tpu.vector_store %arg7[%c0_11, %c0_12], %25 {strides = array<i32>} : memref<16x16xf32, #tpu.memory_space<vmem>>, vector<16x16xf32>,
    } else {
    }
    %c0_i32_6 = arith.constant 0 : i32
    %19 = arith.cmpi eq, %arg1, %c0_i32_6 : i32
    %20 = arith.extui %19 : i1 to i32
    %c0_i32_7 = arith.constant 0 : i32
    %21 = arith.cmpi ne, %20, %c0_i32_7 : i32
    scf.if %21 {
      %c0_8 = arith.constant 0 : index
      %c0_9 = arith.constant 0 : index
      %22 = vector.load %arg7[%c0_8, %c0_9] : memref<16x16xf32, #tpu.memory_space<vmem>>, vector<16x16xf32>
      %23 = vector.shape_cast %22 : vector<16x16xf32> to vector<1x16x16xf32>
      %cst_10 = arith.constant dense<0.000000e+00> : vector<1xf32>
      %24 = vector.multi_reduction <add>, %23, %cst_10 [1, 2] : vector<1x16x16xf32> to vector<1xf32>
      %25 = vector.shape_cast %24 : vector<1xf32> to vector<1x1x1xf32>
      %26 = vector.extract %25[0, 0, 0] : f32 from vector<1x1x1xf32>
      %cst_11 = arith.constant 2.000000e+00 : f32
      %27 = arith.mulf %cst_11, %26 : f32
      %cst_12 = arith.constant 0.000000e+00 : f32
      %28 = vector.broadcast %cst_12 : f32 to vector<1x8x128xf32>
      %29 = vector.broadcast %27 : f32 to vector<1x8x128xf32>
      %30 = arith.addf %28, %29 : vector<1x8x128xf32>
      %c0_13 = arith.constant 0 : index
      %c0_14 = arith.constant 0 : index
      %c0_15 = arith.constant 0 : index
      %31 = vector.load %arg6[%c0_13, %c0_14, %c0_15] : memref<1x8x128xf32, #tpu.memory_space<vmem>>, vector<1x8x128xf32>
      tpu.vector_store %arg6[%c0_13, %c0_14, %c0_15], %30 {strides = array<i32>} : memref<1x8x128xf32, #tpu.memory_space<vmem>>, vector<1x8x128xf32>,
    } else {
    }
    return
  }
  func.func @transform_0(%arg0: i32, %arg1: i32, %arg2: memref<1xi32, #tpu.memory_space<smem>>, %arg3: memref<1xi32, #tpu.memory_space<smem>>) -> (i32, i32) {
    %c1_i32 = arith.constant 1 : i32
    %0 = arith.muli %arg0, %c1_i32 : i32
    %1 = arith.addi %0, %arg1 : i32
    %2 = arith.index_cast %1 : i32 to index
    %3 = memref.load %arg2[%2] : memref<1xi32, #tpu.memory_space<smem>>
    %c0_i32 = arith.constant 0 : i32
    %c0_i32_0 = arith.constant 0 : i32
    return %3, %c0_i32 : i32, i32
  }
  func.func @transform_1(%arg0: i32, %arg1: i32, %arg2: memref<1xi32, #tpu.memory_space<smem>>, %arg3: memref<1xi32, #tpu.memory_space<smem>>) -> (i32, i32) {
    %c1_i32 = arith.constant 1 : i32
    %0 = arith.muli %arg0, %c1_i32 : i32
    %1 = arith.addi %0, %arg1 : i32
    %2 = arith.index_cast %1 : i32 to index
    %3 = memref.load %arg3[%2] : memref<1xi32, #tpu.memory_space<smem>>
    %c0_i32 = arith.constant 0 : i32
    %c0_i32_0 = arith.constant 0 : i32
    return %3, %c0_i32 : i32, i32
  }
  func.func @transform_2(%arg0: i32, %arg1: i32, %arg2: memref<1xi32, #tpu.memory_space<smem>>, %arg3: memref<1xi32, #tpu.memory_space<smem>>) -> (i32, i32, i32) {
    %c0_i32 = arith.constant 0 : i32
    %c0_i32_0 = arith.constant 0 : i32
    %c0_i32_1 = arith.constant 0 : i32
    return %arg0, %c0_i32, %c0_i32_0 : i32, i32, i32
  }
}

</mosaic_0001>

<llo_original>
// kernel: tpu_custom_call.1
$region0: #{tpu_custom_call.1}
  #allocation0 [shape = 'u32[]', space=smem, size = 0x4, offset = 0x4, fixed_abs, tag = 'smem constant byte address 0x4 - core index']
  #allocation1 [shape = 'u32[144,128]{1,0:T(1,128)}', space=vmem, size = 0x12000, scoped, tag = 'internal scratch']
  #allocation2 [shape = 'f32[16,16]{1,0:T(8,128)}', space=vmem, size = 0x2000, scoped, tag = 'scratch operand']
  #allocation3 [shape = 's32[1]{0}', space=sflag, size = 0x4, scoped, tag = 'scoped memory for tpu_custom_call.1']
  #allocation4 [shape = 's32[1]{0:T(128)S(6)}', space=smem, size = 0x200, scoped, tag = 'prefetched SMEM operand 0']
  #allocation5 [shape = 's32[1]{0:T(128)S(6)}', space=smem, size = 0x200, scoped, tag = 'prefetched SMEM operand 1']
  %s0 = inlined_call_operand.<no memory space> [shape: s32[1], index: 0, kind: input, shape index: {}]
  %s1 = inlined_call_operand.<no memory space> [shape: s32[1], index: 1, kind: input, shape index: {}]
  %s2 = inlined_call_operand.hbm [shape: bf16[16,32], index: 2, kind: input, shape index: {}]
  %s3 = inlined_call_operand.vmem [shape: bf16[16,32], index: 3, kind: input, shape index: {}]
  %s4 = inlined_call_operand.hbm [shape: f32[1,8,128], index: 4, kind: output, shape index: {}]
  %s5 = sld [smem:[#allocation0]]
  $region38: #{tpu_custom_call.1} parent=0
    _
  %s7 = ssub.s32 1, %s5
  %s8 = scalar_select 0, %s7, %s5
  %9 = sst [smem:[#allocation4]] %s0
  %10 = sst [smem:[#allocation5]] %s1
  $region1: #{tpu_custom_call.1} parent=0
    #allocation6 [shape = 'u8[4096]{0}', space=vmem, size = 0x1000, scoped, tag = 'input window, operand 2, single buffered']
    #allocation7 [shape = 's32[1]{0}', space=sflag, size = 0x4, scoped, tag = 'scoped memory for tpu_custom_call.1']
    #allocation8 [shape = 's32[1]{0}', space=sflag, size = 0x4, scoped, tag = 'scoped memory for tpu_custom_call.1']
    #allocation9 [shape = 'u8[4096]{0}', space=vmem, size = 0x1000, scoped, tag = 'output window, operand 0, single buffered']
    %11 = vsyncpa [#allocation7], 0
    %12 = vsyncpa [#allocation8], 0
    // Predicated region
    $region2: #{tpu_custom_call.1} parent=1 // pred_check
      _
    $region3: #{tpu_custom_call.1} parent=1 // pred_check_branch
      %14 = sbr.rel (0) target = $region5
    $region4: #{tpu_custom_call.1} parent=1 // pred_region
      %s15 = sadd.s32 0, 0
      %s16 = sld [smem:[#allocation4 + %s15]]
      %s17 = smul.u32 2, %s16
      %s19 = ssub.s32 128, 128
      %20 = vsyncadd [#allocation7], %s19
      %s21 = smul.addr %s17, 64
      %s22 = scalar_lea.hbm %s2, %s21
      %s23 = sshll.u32 [#allocation6], 4
      %s24 = int_to_ptr.vmem [resolvable:$true] %s23
      %29 = dma.hbm_to_vmem [thread:$0]  %s22, 128, %s24, [#allocation7], 64, 64, 4
    $region5: #{tpu_custom_call.1} parent=1 // pred_fallthru
      _
    // Predicated region
    $region6: #{tpu_custom_call.1} parent=1 // pred_check
      _
    $region7: #{tpu_custom_call.1} parent=1 // pred_check_branch
      %31 = sbr.rel (0) target = $region9
    $region8: #{tpu_custom_call.1} parent=1 // pred_region
      %s32 = sadd.s32 0, 0
      %s33 = sld [smem:[#allocation5 + %s32]]
      %s34 = smul.u32 2, %s33
      %p35 = scmp.lt.s32.totalorder %s34, 1
      %s36 = scalar_select %p35, %s34, 1
      %s37 = smul.addr %s36, 4
      %s38 = scalar_lea.vmem %s3, %s37
      %s39 = sadd.s32 0, 0
      %s40 = sld [smem:[#allocation5 + %s39]]
      %s41 = smul.u32 2, %s40
    $region9: #{tpu_custom_call.1} parent=1 // pred_fallthru
      _
    // Predicated region
    $region10: #{tpu_custom_call.1} parent=1 // pred_check
      _
    $region11: #{tpu_custom_call.1} parent=1 // pred_check_branch
      %43 = sbr.rel (0) target = $region13
    $region12: #{tpu_custom_call.1} parent=1 // pred_region
      %44 = dma.done [#allocation7], 128
    $region13: #{tpu_custom_call.1} parent=1 // pred_fallthru
      _
    %s45 = sadd.s32 0, 0
    %s46 = sld [smem:[#allocation5 + %s45]]
    %s47 = smul.u32 2, %s46
    %p48 = scmp.lt.s32.totalorder %s47, 1
    %s49 = scalar_select %p48, %s47, 1
    %s50 = smul.addr %s49, 4
    %s51 = scalar_lea.vmem %s3, %s50
    %s52 = sadd.s32 0, 0
    %s53 = sld [smem:[#allocation4 + %s52]]
    %s54 = smul.u32 2, %s53
    %s55 = sadd.s32 0, 0
    %s56 = sld [smem:[#allocation5 + %s55]]
    %s57 = smul.u32 2, %s56
    %p58 = scmp.lt.s32.totalorder %s57, 1
    %s59 = scalar_select %p58, %s57, 1
    %s60 = smul.addr %s59, 4
    %s61 = scalar_lea.vmem %s3, %s60
    %s62 = sadd.s32 0, 0
    %s63 = sld [smem:[#allocation5 + %s62]]
    %s64 = smul.u32 2, %s63
    %p66 = scmp.eq.s32.totalorder 0, 0
    // Predicated region
    $region14: #{tpu_custom_call.1} parent=1 // pred_check
      %p67 = pneg %p66
    $region15: #{tpu_custom_call.1} parent=1 // pred_check_branch
      %69 = sbr.rel (%p67) target = $region17
    $region16: #{tpu_custom_call.1} parent=1 // pred_region
      %vm70 = vcmask 130048
      %71 = vst.msk [vmem:[#allocation2] sm:$0xff] %vm70, 0.0
      %72 = vst.msk [vmem:[#allocation2 + $0x8] sm:$0xff] %vm70, 0.0
    $region17: #{tpu_custom_call.1} parent=1 // pred_fallthru
      _
    %s73 = sadd.s32 0, 0
    %s74 = sld [smem:[#allocation4 + %s73]]
    %s75 = sld [smem:[#allocation5 + %s73]]
    %v76 = vld [vmem:[#allocation6] sm:$0xf]
    %v77 = vld [vmem:[#allocation6 + $0x4] sm:$0xf]
    %v78 = vld [vmem:[%s61] sm:$0xf]
    %v79 = vld [vmem:[%s61 + $0x4] sm:$0xf]
    %v82 = vunpack.c.l.b16 %v76
    %v83 = vunpack.c.l.b16 %v77
    %v84 = vpack.c.b16 %v83, %v82
    %v87 = vunpack.c.l.b16 %v78
    %v88 = vunpack.c.l.b16 %v79
    %v89 = vpack.c.b16 %v88, %v87
    %vm90 = vcmask 261120
    %v92 = vsel %vm90, %v84, 0
    %v95 = vsel %vm90, %v89, 0
    %97 = vmatprep.subr.bf16.mxu0 0
    %98 = vmatpush1.bf16.xpose.msra.mxu0 %v95
    %99 = vmatprep.subr.bf16.mxu0 0
    %100 = vmatpush1.bf16.xpose.msra.mxu0 0
    %101 = vmatprep.subr.bf16.mxu0 0
    %102 = vmatpush1.bf16.xpose.msra.mxu0 0
    %103 = vmatprep.subr.bf16.mxu0 0
    %104 = vmatpush1.bf16.xpose.msra.mxu0 0
    %105 = vmatprep.subr.bf16.mxu0 0
    %106 = vmatpush1.bf16.xpose.msra.mxu0 0
    %107 = vmatprep.subr.bf16.mxu0 0
    %108 = vmatpush1.bf16.xpose.msra.mxu0 0
    %109 = vmatprep.subr.bf16.mxu0 0
    %110 = vmatpush1.bf16.xpose.msra.mxu0 0
    %111 = vmatprep.subr.bf16.mxu0 0
    %112 = vmatpush1.bf16.xpose.msra.mxu0 0
    %113 = vmatprep.subr.bf16.mxu0 0
    %114 = vmatpush1.bf16.xpose.msra.mxu0 0
    %115 = vmatprep.subr.bf16.mxu0 0
    %116 = vmatpush1.bf16.xpose.msra.mxu0 0
    %117 = vmatprep.subr.bf16.mxu0 0
    %118 = vmatpush1.bf16.xpose.msra.mxu0 0
    %119 = vmatprep.subr.bf16.mxu0 0
    %120 = vmatpush1.bf16.xpose.msra.mxu0 0
    %121 = vmatprep.subr.bf16.mxu0 0
    %122 = vmatpush1.bf16.xpose.msra.mxu0 0
    %123 = vmatprep.subr.bf16.mxu0 0
    %124 = vmatpush1.bf16.xpose.msra.mxu0 0
    %125 = vmatprep.subr.bf16.mxu0 0
    %126 = vmatpush1.bf16.xpose.msra.mxu0 0
    %127 = vmatprep.subr.bf16.mxu0 0
    %128 = vmatpush1.bf16.xpose.msra.mxu0 0
    %129 = vmatprep.mubr.bf16.mxu0 0
    %130 = vmatmul.mubr.bf16.gmra.mrb[0].mxu0 %v92
    %v131 = vpop.f32.mrb[0].mxu0
    %v132 = vadd.f32 0.0, %v131
    %v133 = vpop.f32.mrb[0].mxu0
    %v134 = vpop.f32.mrb[0].mxu0
    %v135 = vadd.f32 0.0, %v134
    %v136 = vpop.f32.mrb[0].mxu0
    %137 = vdwg.mxu0
    %v138 = vmul.f32 %v132, %v132
    %v139 = vmul.f32 %v135, %v135
    %p140 = scmp.eq.s32.totalorder %s74, %s75
    %p141 = scmp.ne.s32.totalorder %s74, %s75
    // Predicated region
    $region18: #{tpu_custom_call.1} parent=1 // pred_check
      %p142 = pneg %p141
    $region19: #{tpu_custom_call.1} parent=1 // pred_check_branch
      %144 = sbr.rel (%p142) target = $region21
    $region20: #{tpu_custom_call.1} parent=1 // pred_region
      %v145 = vld [vmem:[#allocation2] sm:$0xff]
      %v146 = vld [vmem:[#allocation2 + $0x8] sm:$0xff]
      %v147 = vadd.f32 %v145, %v138
      %v148 = vadd.f32 %v146, %v139
      %vm149 = vcmask 130048
      %150 = vst.msk [vmem:[#allocation2] sm:$0xff] %vm149, %v147
      %151 = vst.msk [vmem:[#allocation2 + $0x8] sm:$0xff] %vm149, %v148
    $region21: #{tpu_custom_call.1} parent=1 // pred_fallthru
      _
    // Predicated region
    $region22: #{tpu_custom_call.1} parent=1 // pred_check
      %p152 = pneg %p140
    $region23: #{tpu_custom_call.1} parent=1 // pred_check_branch
      %154 = sbr.rel (%p152) target = $region25
    $region24: #{tpu_custom_call.1} parent=1 // pred_region
      %v155 = vld [vmem:[#allocation2] sm:$0xff]
      %v156 = vld [vmem:[#allocation2 + $0x8] sm:$0xff]
      %v157 = vmul.f32 %v138, 0.5
      %v158 = vmul.f32 %v139, 0.5
      %v159 = vadd.f32 %v155, %v157
      %v160 = vadd.f32 %v156, %v158
      %vm161 = vcmask 130048
      %162 = vst.msk [vmem:[#allocation2] sm:$0xff] %vm161, %v159
      %163 = vst.msk [vmem:[#allocation2 + $0x8] sm:$0xff] %vm161, %v160
    $region25: #{tpu_custom_call.1} parent=1 // pred_fallthru
      _
    // Predicated region
    $region26: #{tpu_custom_call.1} parent=1 // pred_check
      %p164 = pneg %p66
    $region27: #{tpu_custom_call.1} parent=1 // pred_check_branch
      %166 = sbr.rel (%p164) target = $region29
    $region28: #{tpu_custom_call.1} parent=1 // pred_region
      %v167 = vld [vmem:[#allocation2] sm:$0xff]
      %v168 = vld [vmem:[#allocation2 + $0x8] sm:$0xff]
      %vm169 = vcmask 130048
      %v170 = vsel %vm169, %v167, 0.0
      %v171 = vsel %vm169, %v168, 0.0
      %v172 = vadd.f32 %v170, %v171
      %173 = vadd.xlane.f32.xlu0 %v172
      %v174 = vpop.xlane.xlu0 %173
      %v175 = vrot.slane %v174, 4
      %v176 = vadd.f32 %v174, %v175
      %v177 = vrot.slane %v176, 2
      %v178 = vadd.f32 %v176, %v177
      %v179 = vrot.slane %v178, 1
      %v180 = vadd.f32 %v178, %v179
      %s181 = vtos %v180
      %s182 = smul.f32 %s181, 2.0
      %v183 = vstv %s182
      %v184 = vadd.f32 %v183, 0.0
      %185 = vst [vmem:[#allocation9] sm:$0xff] %v184
    $region29: #{tpu_custom_call.1} parent=1 // pred_fallthru
      _
    // Predicated region
    $region30: #{tpu_custom_call.1} parent=1 // pred_check
      _
    $region31: #{tpu_custom_call.1} parent=1 // pred_check_branch
      %187 = sbr.rel (0) target = $region33
    $region32: #{tpu_custom_call.1} parent=1 // pred_region
      %s189 = ssub.s32 128, 128
      %190 = vsyncadd [#allocation8], %s189
      %s192 = sshll.u32 [#allocation9], 4
      %s193 = int_to_ptr.vmem [resolvable:$true] %s192
      %195 = dma.vmem_to_hbm [thread:$0]  %s193, 128, %s4, [#allocation8]
    $region33: #{tpu_custom_call.1} parent=1 // pred_fallthru
      _
    // Predicated region
    $region34: #{tpu_custom_call.1} parent=1 // pred_check
      _
    $region35: #{tpu_custom_call.1} parent=1 // pred_check_branch
      %197 = sbr.rel (0) target = $region37
    $region36: #{tpu_custom_call.1} parent=1 // pred_region
      %198 = dma.done [#allocation8], 128
    $region37: #{tpu_custom_call.1} parent=1 // pred_fallthru
      _
    %199 = vsyncpa [#allocation7], 1
    %200 = vsyncpa [#allocation8], 1

</llo_original>
